<compile_context>
chip_gen: v7x
topology: tpu7x:2x2x1
jax: 0.10.0
libtpu: 0.0.40
codegen_flags: <defaults>
</compile_context>

<pallas_src>
import functools

import jax
import jax.numpy as jnp
from jax.experimental import pallas as pl
from jax.experimental.pallas import tpu as pltpu

BN_EPS = 1e-5
NEG_SLOPE = 0.2


def _pick_tile(dim, preferred):
    """Largest 128-aligned tile (<= preferred) that divides `dim`, else full dim."""
    if dim % 128 != 0:
        return dim  # unaligned / tiny dim: single full-extent block
    for t in (preferred, 512, 256, 128):
        if t <= dim and dim % t == 0:
            return t
    return dim


def _linear_bn_kernel(x_ref, w_ref, gamma_ref, beta_ref, o_ref, acc_ref, *, apply_relu):
    k = pl.program_id(1)

    @pl.when(k == 0)
    def _():
        acc_ref[...] = jnp.zeros_like(acc_ref)

    # bf16 x bf16 matmul on the MXU with f32 accumulation.
    acc_ref[...] += jnp.dot(
        x_ref[...], w_ref[...], preferred_element_type=jnp.float32
    )

    @pl.when(k == pl.num_programs(1) - 1)
    def _():
        y = acc_ref[...]
        # BatchNorm1d, training mode: per-feature stats over the full batch
        # (N is never tiled, so these are exact batch statistics), biased
        # variance, eps inside the rsqrt — matches PyTorch normalization.
        mean = jnp.mean(y, axis=0, keepdims=True)
        var = jnp.mean((y - mean) * (y - mean), axis=0, keepdims=True)
        y = (y - mean) * jax.lax.rsqrt(var + BN_EPS)
        y = y * gamma_ref[...] + beta_ref[...]
        if apply_relu:
            # LeakyReLU(0.2): max(y, 0.2*y) — single VALU max per vreg.
            y = jnp.maximum(y, NEG_SLOPE * y)
        o_ref[...] = y.astype(o_ref.dtype)


def linear_bn(x, w, gamma, beta, *, apply_relu, out_dtype,
              tn_pref=512, tk_pref=512):
    """Fused Linear(bias-free) + BatchNorm1d(+LeakyReLU) Pallas kernel.

    x: (N, in_dim) bf16, w: (in_dim, out_dim) bf16, gamma/beta: (1, out_dim) f32.
    The batch dimension is kept fully resident (required for exact BN stats);
    out_dim and in_dim are tiled so weight tiles stream and pipeline.
    """
    n, in_dim = x.shape
    assert w.shape[0] == in_dim
    out_dim = w.shape[1]

    tn = _pick_tile(out_dim, tn_pref)
    tk = _pick_tile(in_dim, tk_pref)
    grid = (out_dim // tn, in_dim // tk)

    kernel = functools.partial(_linear_bn_kernel, apply_relu=apply_relu)
    return pl.pallas_call(
        kernel,
        out_shape=jax.ShapeDtypeStruct((n, out_dim), out_dtype),
        grid_spec=pltpu.PrefetchScalarGridSpec(
            num_scalar_prefetch=0,
            grid=grid,
            in_specs=[
                pl.BlockSpec((n, tk), lambda j, k: (0, k)),     # x: full batch, K tile
                pl.BlockSpec((tk, tn), lambda j, k: (k, j)),    # w: (K, Nout) tile
                pl.BlockSpec((1, tn), lambda j, k: (0, j)),     # gamma
                pl.BlockSpec((1, tn), lambda j, k: (0, j)),     # beta
            ],
            out_specs=pl.BlockSpec((n, tn), lambda j, k: (0, j)),
            scratch_shapes=[pltpu.VMEM((n, tn), jnp.float32)],  # f32 accumulator
        ),
        compiler_params=pltpu.CompilerParams(
            # out-feature tiles are independent -> megacore-parallel on v7x;
            # K is the reduction axis (accumulator carried) -> arbitrary.
            dimension_semantics=("parallel", "arbitrary"),
            vmem_limit_bytes=32 * 1024 * 1024,  # safe on v5e/v6e/v7x
        ),
    )(x, w, gamma, beta)


def init_linear(key, in_dim, out_dim):
    """Weight init mimicking nn.Linear defaults; stored (in, out) in bf16.

    The bias is intentionally omitted: it is mathematically cancelled by the
    BatchNorm mean subtraction that immediately follows.
    """
    bound = 1.0 / jnp.sqrt(jnp.float32(in_dim))
    w = jax.random.uniform(key, (in_dim, out_dim), jnp.float32, -bound, bound)
    return w.astype(jnp.bfloat16)


def init_bn(dim):
    # BatchNorm1d default: gamma=1, beta=0 (kept f32 for the epilogue math).
    return jnp.ones((1, dim), jnp.float32), jnp.zeros((1, dim), jnp.float32)


def init_projection_mlp(key, in_dim, hidden_dim, out_dim):
    k1, k2, k3 = jax.random.split(key, 3)
    params = {}
    params["w1"] = init_linear(k1, in_dim, hidden_dim)
    params["g1"], params["be1"] = init_bn(hidden_dim)
    params["w2"] = init_linear(k2, hidden_dim, hidden_dim)
    params["g2"], params["be2"] = init_bn(hidden_dim)
    params["w3"] = init_linear(k3, hidden_dim, out_dim)
    params["g3"], params["be3"] = init_bn(out_dim)
    return params


def projection_mlp_forward(params, x, num_layers=3):
    """Matches projection_MLP.forward semantics (training-mode BN).

    Intermediate activations are kept in bf16 to halve inter-layer HBM traffic;
    the final layer output is f32.
    """
    x = x.astype(jnp.bfloat16)
    if num_layers == 3:
        x = linear_bn(x, params["w1"], params["g1"], params["be1"],
                      apply_relu=True, out_dtype=jnp.bfloat16)
        x = linear_bn(x, params["w2"], params["g2"], params["be2"],
                      apply_relu=True, out_dtype=jnp.bfloat16)
        x = linear_bn(x, params["w3"], params["g3"], params["be3"],
                      apply_relu=False, out_dtype=jnp.float32)
    elif num_layers == 2:
        x = linear_bn(x, params["w1"], params["g1"], params["be1"],
                      apply_relu=True, out_dtype=jnp.bfloat16)
        x = linear_bn(x, params["w3"], params["g3"], params["be3"],
                      apply_relu=False, out_dtype=jnp.float32)
    elif num_layers == 1:
        x = linear_bn(x, params["w3"], params["g3"], params["be3"],
                      apply_relu=False, out_dtype=jnp.float32)
    elif num_layers == 0:
        pass
    else:
        raise Exception
    return x


if __name__ == "__main__":
    # Small, lane-aligned shapes consistent with the module (real projector
    # would be hidden=out=2048; we use 128-multiples so the tiled path runs).
    N, IN_DIM, HIDDEN, OUT = 64, 256, 512, 256

    key = jax.random.PRNGKey(0)
    kx, kp = jax.random.split(key)
    x = jax.random.normal(kx, (N, IN_DIM), jnp.float32)
    params = init_projection_mlp(kp, IN_DIM, HIDDEN, OUT)

    out = projection_mlp_forward(params, x, num_layers=3)
    jax.block_until_ready(out)
    assert out.shape == (N, OUT)
    assert out.dtype == jnp.float32
    assert bool(jnp.all(jnp.isfinite(out)))
    print("KERNEL_OK")
</pallas_src>

<mosaic_0001>
module attributes {stable_mosaic.version = 11 : i64} {
  func.func @_linear_bn_kernel(%arg0: i32, %arg1: i32, %arg2: memref<64x256xbf16, #tpu.memory_space<vmem>>, %arg3: memref<256x512xbf16, #tpu.memory_space<vmem>>, %arg4: memref<1x512xf32, #tpu.memory_space<vmem>>, %arg5: memref<1x512xf32, #tpu.memory_space<vmem>>, %arg6: memref<64x512xbf16, #tpu.memory_space<vmem>>, %arg7: memref<64x512xf32, #tpu.memory_space<vmem>>) attributes {dimension_semantics = [#tpu.dimension_semantics<parallel>, #tpu.dimension_semantics<arbitrary>], iteration_bounds = array<i64: 1, 1>, scalar_prefetch = 0 : i64, scratch_operands = 1 : i64, tpu.core_type = #tpu.core_type<tc>, window_params = [{transform_indices = @transform_0, window_bounds = array<i64: 64, 256>}, {transform_indices = @transform_1, window_bounds = array<i64: 256, 512>}, {transform_indices = @transform_2, window_bounds = array<i64: 1, 512>}, {transform_indices = @transform_3, window_bounds = array<i64: 1, 512>}, {transform_indices = @transform_4, window_bounds = array<i64: 64, 512>}]} {
    %c0_i32 = arith.constant 0 : i32
    %0 = arith.cmpi eq, %arg1, %c0_i32 : i32
    %1 = arith.extui %0 : i1 to i32
    %c0_i32_0 = arith.constant 0 : i32
    %2 = arith.cmpi ne, %1, %c0_i32_0 : i32
    scf.if %2 {
      %cst_10 = arith.constant 0.000000e+00 : f32
      %12 = vector.broadcast %cst_10 : f32 to vector<64x512xf32>
      %c0_11 = arith.constant 0 : index
      %c0_12 = arith.constant 0 : index
      %13 = vector.load %arg7[%c0_11, %c0_12] : memref<64x512xf32, #tpu.memory_space<vmem>>, vector<64x512xf32>
      tpu.vector_store %arg7[%c0_11, %c0_12], %12 {strides = array<i32>} : memref<64x512xf32, #tpu.memory_space<vmem>>, vector<64x512xf32>,
    } else {
    }
    %c0 = arith.constant 0 : index
    %c0_1 = arith.constant 0 : index
    %3 = vector.load %arg7[%c0, %c0_1] : memref<64x512xf32, #tpu.memory_space<vmem>>, vector<64x512xf32>
    %c0_2 = arith.constant 0 : index
    %c0_3 = arith.constant 0 : index
    %4 = vector.load %arg2[%c0_2, %c0_3] : memref<64x256xbf16, #tpu.memory_space<vmem>>, vector<64x256xbf16>
    %c0_4 = arith.constant 0 : index
    %c0_5 = arith.constant 0 : index
    %5 = vector.load %arg3[%c0_4, %c0_5] : memref<256x512xbf16, #tpu.memory_space<vmem>>, vector<256x512xbf16>
    %cst = arith.constant dense<0.000000e+00> : vector<64x512xf32>
    %6 = tpu.matmul %4, %5, %cst {dimension_numbers = #tpu.dot_dimension_numbers<[1], [0], [0], [1], [0, 0, 1, 1], [], []>} : vector<64x256xbf16>, vector<256x512xbf16>, vector<64x512xf32> -> vector<64x512xf32>
    %7 = arith.addf %3, %6 : vector<64x512xf32>
    %c0_6 = arith.constant 0 : index
    %c0_7 = arith.constant 0 : index
    %8 = vector.load %arg7[%c0_6, %c0_7] : memref<64x512xf32, #tpu.memory_space<vmem>>, vector<64x512xf32>
    tpu.vector_store %arg7[%c0_6, %c0_7], %7 {strides = array<i32>} : memref<64x512xf32, #tpu.memory_space<vmem>>, vector<64x512xf32>,
    %c0_i32_8 = arith.constant 0 : i32
    %9 = arith.cmpi eq, %arg1, %c0_i32_8 : i32
    %10 = arith.extui %9 : i1 to i32
    %c0_i32_9 = arith.constant 0 : i32
    %11 = arith.cmpi ne, %10, %c0_i32_9 : i32
    scf.if %11 {
      %c0_10 = arith.constant 0 : index
      %c0_11 = arith.constant 0 : index
      %12 = vector.load %arg7[%c0_10, %c0_11] : memref<64x512xf32, #tpu.memory_space<vmem>>, vector<64x512xf32>
      %cst_12 = arith.constant dense<0.000000e+00> : vector<512xf32>
      %13 = vector.multi_reduction <add>, %12, %cst_12 [0] : vector<64x512xf32> to vector<512xf32>
      %14 = vector.shape_cast %13 : vector<512xf32> to vector<1x512xf32>
      %cst_13 = arith.constant 6.400000e+01 : f32
      %15 = vector.broadcast %cst_13 : f32 to vector<1x512xf32>
      %16 = arith.divf %14, %15 : vector<1x512xf32>
      %17 = vector.broadcast %16 : vector<1x512xf32> to vector<64x512xf32>
      %18 = arith.subf %12, %17 : vector<64x512xf32>
      %19 = vector.broadcast %16 : vector<1x512xf32> to vector<64x512xf32>
      %20 = arith.subf %12, %19 : vector<64x512xf32>
      %21 = arith.mulf %18, %20 : vector<64x512xf32>
      %cst_14 = arith.constant dense<0.000000e+00> : vector<512xf32>
      %22 = vector.multi_reduction <add>, %21, %cst_14 [0] : vector<64x512xf32> to vector<512xf32>
      %23 = vector.shape_cast %22 : vector<512xf32> to vector<1x512xf32>
      %cst_15 = arith.constant 6.400000e+01 : f32
      %24 = vector.broadcast %cst_15 : f32 to vector<1x512xf32>
      %25 = arith.divf %23, %24 : vector<1x512xf32>
      %26 = vector.broadcast %16 : vector<1x512xf32> to vector<64x512xf32>
      %27 = arith.subf %12, %26 : vector<64x512xf32>
      %cst_16 = arith.constant 9.99999974E-6 : f32
      %28 = vector.broadcast %cst_16 : f32 to vector<1x512xf32>
      %29 = arith.addf %25, %28 : vector<1x512xf32>
      %30 = math.rsqrt %29 : vector<1x512xf32>
      %31 = vector.broadcast %30 : vector<1x512xf32> to vector<64x512xf32>
      %32 = arith.mulf %27, %31 : vector<64x512xf32>
      %c0_17 = arith.constant 0 : index
      %c0_18 = arith.constant 0 : index
      %33 = vector.load %arg4[%c0_17, %c0_18] : memref<1x512xf32, #tpu.memory_space<vmem>>, vector<1x512xf32>
      %34 = vector.broadcast %33 : vector<1x512xf32> to vector<64x512xf32>
      %35 = arith.mulf %32, %34 : vector<64x512xf32>
      %c0_19 = arith.constant 0 : index
      %c0_20 = arith.constant 0 : index
      %36 = vector.load %arg5[%c0_19, %c0_20] : memref<1x512xf32, #tpu.memory_space<vmem>>, vector<1x512xf32>
      %37 = vector.broadcast %36 : vector<1x512xf32> to vector<64x512xf32>
      %38 = arith.addf %35, %37 : vector<64x512xf32>
      %cst_21 = arith.constant 2.000000e-01 : f32
      %39 = vector.broadcast %cst_21 : f32 to vector<64x512xf32>
      %40 = arith.mulf %39, %38 : vector<64x512xf32>
      %41 = arith.maximumf %38, %40 : vector<64x512xf32>
      %42 = arith.truncf %41 : vector<64x512xf32> to vector<64x512xbf16>
      %c0_22 = arith.constant 0 : index
      %c0_23 = arith.constant 0 : index
      %43 = vector.load %arg6[%c0_22, %c0_23] : memref<64x512xbf16, #tpu.memory_space<vmem>>, vector<64x512xbf16>
      tpu.vector_store %arg6[%c0_22, %c0_23], %42 {strides = array<i32>} : memref<64x512xbf16, #tpu.memory_space<vmem>>, vector<64x512xbf16>,
    } else {
    }
    return
  }
  func.func @transform_0(%arg0: i32, %arg1: i32) -> (i32, i32) {
    %c0_i32 = arith.constant 0 : i32
    %c0_i32_0 = arith.constant 0 : i32
    return %c0_i32, %arg1 : i32, i32
  }
  func.func @transform_1(%arg0: i32, %arg1: i32) -> (i32, i32) {
    %c0_i32 = arith.constant 0 : i32
    return %arg1, %arg0 : i32, i32
  }
  func.func @transform_2(%arg0: i32, %arg1: i32) -> (i32, i32) {
    %c0_i32 = arith.constant 0 : i32
    %c0_i32_0 = arith.constant 0 : i32
    return %c0_i32, %arg0 : i32, i32
  }
  func.func @transform_3(%arg0: i32, %arg1: i32) -> (i32, i32) {
    %c0_i32 = arith.constant 0 : i32
    %c0_i32_0 = arith.constant 0 : i32
    return %c0_i32, %arg0 : i32, i32
  }
  func.func @transform_4(%arg0: i32, %arg1: i32) -> (i32, i32) {
    %c0_i32 = arith.constant 0 : i32
    %c0_i32_0 = arith.constant 0 : i32
    return %c0_i32, %arg0 : i32, i32
  }
}

</mosaic_0001>

<llo_original>
// kernel: tpu_custom_call.1
$region0: #{tpu_custom_call.1}
  #allocation0 [shape = 'u32[]', space=smem, size = 0x4, offset = 0x4, fixed_abs, tag = 'smem constant byte address 0x4 - core index']
  #allocation1 [shape = 'u32[144,128]{1,0:T(1,128)}', space=vmem, size = 0x12000, scoped, tag = 'internal scratch']
  #allocation2 [shape = 'f32[64,512]{1,0:T(8,128)}', space=vmem, size = 0x20000, scoped, tag = 'scratch operand']
  %s0 = inlined_call_operand.hbm [shape: bf16[64,256], index: 0, kind: input, shape index: {}]
  %s1 = inlined_call_operand.hbm [shape: bf16[256,512], index: 1, kind: input, shape index: {}]
  %s2 = inlined_call_operand.vmem [shape: f32[1,512], index: 2, kind: input, shape index: {}]
  %s3 = inlined_call_operand.vmem [shape: f32[1,512], index: 3, kind: input, shape index: {}]
  %s4 = inlined_call_operand.hbm [shape: bf16[64,512], index: 4, kind: output, shape index: {}]
  %s5 = sld [smem:[#allocation0]]
  $region42: #{tpu_custom_call.1} parent=0
    _
  %s7 = ssub.s32 1, %s5
  %s8 = scalar_select 0, %s7, %s5
  $region1: #{tpu_custom_call.1} parent=0
    #allocation3 [shape = 'u8[32768]{0}', space=vmem, size = 0x8000, scoped, tag = 'input window, operand 0, single buffered']
    #allocation4 [shape = 's32[1]{0}', space=sflag, size = 0x4, scoped, tag = 'scoped memory for tpu_custom_call.1']
    #allocation5 [shape = 's32[1]{0}', space=sflag, size = 0x4, scoped, tag = 'scoped memory for tpu_custom_call.1']
    #allocation6 [shape = 'u8[262144]{0}', space=vmem, size = 0x40000, scoped, tag = 'input window, operand 1, single buffered']
    #allocation7 [shape = 's32[1]{0}', space=sflag, size = 0x4, scoped, tag = 'scoped memory for tpu_custom_call.1']
    #allocation8 [shape = 'u8[65536]{0}', space=vmem, size = 0x10000, scoped, tag = 'output window, operand 0, single buffered']
    %9 = vsyncpa [#allocation4], 0
    %10 = vsyncpa [#allocation7], 0
    %11 = vsyncpa [#allocation5], 0
    // Predicated region
    $region2: #{tpu_custom_call.1} parent=1 // pred_check
      _
    $region3: #{tpu_custom_call.1} parent=1 // pred_check_branch
      %13 = sbr.rel (0) target = $region5
    $region4: #{tpu_custom_call.1} parent=1 // pred_region
      %s15 = ssub.s32 1024, 1024
      %16 = vsyncadd [#allocation4], %s15
      %s17 = sshll.u32 [#allocation3], 4
      %s18 = int_to_ptr.vmem [resolvable:$true] %s17
      %23 = dma.hbm_to_vmem [thread:$0]  %s0, 1024, %s18, [#allocation4], 128, 128, 8
    $region5: #{tpu_custom_call.1} parent=1 // pred_fallthru
      _
    // Predicated region
    $region6: #{tpu_custom_call.1} parent=1 // pred_check
      _
    $region7: #{tpu_custom_call.1} parent=1 // pred_check_branch
      %25 = sbr.rel (0) target = $region9
    $region8: #{tpu_custom_call.1} parent=1 // pred_region
      %s27 = ssub.s32 8192, 8192
      %28 = vsyncadd [#allocation7], %s27
      %s29 = sshll.u32 [#allocation6], 4
      %s30 = int_to_ptr.vmem [resolvable:$true] %s29
      %35 = dma.hbm_to_vmem [thread:$0]  %s1, 8192, %s30, [#allocation7], 256, 256, 16
    $region9: #{tpu_custom_call.1} parent=1 // pred_fallthru
      _
    // Predicated region
    $region10: #{tpu_custom_call.1} parent=1 // pred_check
      _
    $region11: #{tpu_custom_call.1} parent=1 // pred_check_branch
      %37 = sbr.rel (0) target = $region13
    $region12: #{tpu_custom_call.1} parent=1 // pred_region
      _
    $region13: #{tpu_custom_call.1} parent=1 // pred_fallthru
      _
    // Predicated region
    $region14: #{tpu_custom_call.1} parent=1 // pred_check
      _
    $region15: #{tpu_custom_call.1} parent=1 // pred_check_branch
      %39 = sbr.rel (0) target = $region17
    $region16: #{tpu_custom_call.1} parent=1 // pred_region
      _
    $region17: #{tpu_custom_call.1} parent=1 // pred_fallthru
      _
    // Predicated region
    $region18: #{tpu_custom_call.1} parent=1 // pred_check
      _
    $region19: #{tpu_custom_call.1} parent=1 // pred_check_branch
      %41 = sbr.rel (0) target = $region21
    $region20: #{tpu_custom_call.1} parent=1 // pred_region
      %42 = dma.done [#allocation4], 1024
    $region21: #{tpu_custom_call.1} parent=1 // pred_fallthru
      _
    // Predicated region
    $region22: #{tpu_custom_call.1} parent=1 // pred_check
      _
    $region23: #{tpu_custom_call.1} parent=1 // pred_check_branch
      %44 = sbr.rel (0) target = $region25
    $region24: #{tpu_custom_call.1} parent=1 // pred_region
      %45 = dma.done [#allocation7], 8192
    $region25: #{tpu_custom_call.1} parent=1 // pred_fallthru
      _
    %p46 = scmp.eq.s32.totalorder 0, 0
    // Predicated region
    $region26: #{tpu_custom_call.1} parent=1 // pred_check
      %p47 = pneg %p46
    $region27: #{tpu_custom_call.1} parent=1 // pred_check_branch
      %49 = sbr.rel (%p47) target = $region29
    $region28: #{tpu_custom_call.1} parent=1 // pred_region
      %50 = vst [vmem:[#allocation2] sm:$0xff] 0.0
      %51 = vst [vmem:[#allocation2 + $0x8] sm:$0xff] 0.0
      %52 = vst [vmem:[#allocation2 + $0x10] sm:$0xff] 0.0
      %53 = vst [vmem:[#allocation2 + $0x18] sm:$0xff] 0.0
      %54 = vst [vmem:[#allocation2 + $0x20] sm:$0xff] 0.0
      %55 = vst [vmem:[#allocation2 + $0x28] sm:$0xff] 0.0
      %56 = vst [vmem:[#allocation2 + $0x30] sm:$0xff] 0.0
      %57 = vst [vmem:[#allocation2 + $0x38] sm:$0xff] 0.0
      %58 = vst [vmem:[#allocation2 + $0x40] sm:$0xff] 0.0
      %59 = vst [vmem:[#allocation2 + $0x48] sm:$0xff] 0.0
      %60 = vst [vmem:[#allocation2 + $0x50] sm:$0xff] 0.0
      %61 = vst [vmem:[#allocation2 + $0x58] sm:$0xff] 0.0
      %62 = vst [vmem:[#allocation2 + $0x60] sm:$0xff] 0.0
      %63 = vst [vmem:[#allocation2 + $0x68] sm:$0xff] 0.0
      %64 = vst [vmem:[#allocation2 + $0x70] sm:$0xff] 0.0
      %65 = vst [vmem:[#allocation2 + $0x78] sm:$0xff] 0.0
      %66 = vst [vmem:[#allocation2 + $0x80] sm:$0xff] 0.0
      %67 = vst [vmem:[#allocation2 + $0x88] sm:$0xff] 0.0
      %68 = vst [vmem:[#allocation2 + $0x90] sm:$0xff] 0.0
      %69 = vst [vmem:[#allocation2 + $0x98] sm:$0xff] 0.0
      %70 = vst [vmem:[#allocation2 + $0xa0] sm:$0xff] 0.0
      %71 = vst [vmem:[#allocation2 + $0xa8] sm:$0xff] 0.0
      %72 = vst [vmem:[#allocation2 + $0xb0] sm:$0xff] 0.0
      %73 = vst [vmem:[#allocation2 + $0xb8] sm:$0xff] 0.0
      %74 = vst [vmem:[#allocation2 + $0xc0] sm:$0xff] 0.0
      %75 = vst [vmem:[#allocation2 + $0xc8] sm:$0xff] 0.0
      %76 = vst [vmem:[#allocation2 + $0xd0] sm:$0xff] 0.0
      %77 = vst [vmem:[#allocation2 + $0xd8] sm:$0xff] 0.0
      %78 = vst [vmem:[#allocation2 + $0xe0] sm:$0xff] 0.0
      %79 = vst [vmem:[#allocation2 + $0xe8] sm:$0xff] 0.0
      %80 = vst [vmem:[#allocation2 + $0xf0] sm:$0xff] 0.0
      %81 = vst [vmem:[#allocation2 + $0xf8] sm:$0xff] 0.0
    $region29: #{tpu_custom_call.1} parent=1 // pred_fallthru
      _
    %v82 = vld [vmem:[#allocation2] sm:$0xff]
    %v83 = vld [vmem:[#allocation2 + $0x8] sm:$0xff]
    %v84 = vld [vmem:[#allocation2 + $0x10] sm:$0xff]
    %v85 = vld [vmem:[#allocation2 + $0x18] sm:$0xff]
    %v86 = vld [vmem:[#allocation2 + $0x20] sm:$0xff]
    %v87 = vld [vmem:[#allocation2 + $0x28] sm:$0xff]
    %v88 = vld [vmem:[#allocation2 + $0x30] sm:$0xff]
    %v89 = vld [vmem:[#allocation2 + $0x38] sm:$0xff]
    %v90 = vld [vmem:[#allocation2 + $0x40] sm:$0xff]
    %v91 = vld [vmem:[#allocation2 + $0x48] sm:$0xff]
    %v92 = vld [vmem:[#allocation2 + $0x50] sm:$0xff]
    %v93 = vld [vmem:[#allocation2 + $0x58] sm:$0xff]
    %v94 = vld [vmem:[#allocation2 + $0x60] sm:$0xff]
    %v95 = vld [vmem:[#allocation2 + $0x68] sm:$0xff]
    %v96 = vld [vmem:[#allocation2 + $0x70] sm:$0xff]
    %v97 = vld [vmem:[#allocation2 + $0x78] sm:$0xff]
    %v98 = vld [vmem:[#allocation2 + $0x80] sm:$0xff]
    %v99 = vld [vmem:[#allocation2 + $0x88] sm:$0xff]
    %v100 = vld [vmem:[#allocation2 + $0x90] sm:$0xff]
    %v101 = vld [vmem:[#allocation2 + $0x98] sm:$0xff]
    %v102 = vld [vmem:[#allocation2 + $0xa0] sm:$0xff]
    %v103 = vld [vmem:[#allocation2 + $0xa8] sm:$0xff]
    %v104 = vld [vmem:[#allocation2 + $0xb0] sm:$0xff]
    %v105 = vld [vmem:[#allocation2 + $0xb8] sm:$0xff]
    %v106 = vld [vmem:[#allocation2 + $0xc0] sm:$0xff]
    %v107 = vld [vmem:[#allocation2 + $0xc8] sm:$0xff]
    %v108 = vld [vmem:[#allocation2 + $0xd0] sm:$0xff]
    %v109 = vld [vmem:[#allocation2 + $0xd8] sm:$0xff]
    %v110 = vld [vmem:[#allocation2 + $0xe0] sm:$0xff]
    %v111 = vld [vmem:[#allocation2 + $0xe8] sm:$0xff]
    %v112 = vld [vmem:[#allocation2 + $0xf0] sm:$0xff]
    %v113 = vld [vmem:[#allocation2 + $0xf8] sm:$0xff]
    %v114 = vld [vmem:[#allocation3] sm:$0xff]
    %v115 = vld [vmem:[#allocation3 + $0x8] sm:$0xff]
    %v116 = vld [vmem:[#allocation3 + $0x10] sm:$0xff]
    %v117 = vld [vmem:[#allocation3 + $0x18] sm:$0xff]
    %v118 = vld [vmem:[#allocation3 + $0x20] sm:$0xff]
    %v119 = vld [vmem:[#allocation3 + $0x28] sm:$0xff]
    %v120 = vld [vmem:[#allocation3 + $0x30] sm:$0xff]
    %v121 = vld [vmem:[#allocation3 + $0x38] sm:$0xff]
    %v122 = vld [vmem:[#allocation6] sm:$0xff]
    %v123 = vld [vmem:[#allocation6 + $0x8] sm:$0xff]
    %v124 = vld [vmem:[#allocation6 + $0x10] sm:$0xff]
    %v125 = vld [vmem:[#allocation6 + $0x18] sm:$0xff]
    %v126 = vld [vmem:[#allocation6 + $0x20] sm:$0xff]
    %v127 = vld [vmem:[#allocation6 + $0x28] sm:$0xff]
    %v128 = vld [vmem:[#allocation6 + $0x30] sm:$0xff]
    %v129 = vld [vmem:[#allocation6 + $0x38] sm:$0xff]
    %v130 = vld [vmem:[#allocation6 + $0x40] sm:$0xff]
    %v131 = vld [vmem:[#allocation6 + $0x48] sm:$0xff]
    %v132 = vld [vmem:[#allocation6 + $0x50] sm:$0xff]
    %v133 = vld [vmem:[#allocation6 + $0x58] sm:$0xff]
    %v134 = vld [vmem:[#allocation6 + $0x60] sm:$0xff]
    %v135 = vld [vmem:[#allocation6 + $0x68] sm:$0xff]
    %v136 = vld [vmem:[#allocation6 + $0x70] sm:$0xff]
    %v137 = vld [vmem:[#allocation6 + $0x78] sm:$0xff]
    %v138 = vld [vmem:[#allocation6 + $0x80] sm:$0xff]
    %v139 = vld [vmem:[#allocation6 + $0x88] sm:$0xff]
    %v140 = vld [vmem:[#allocation6 + $0x90] sm:$0xff]
    %v141 = vld [vmem:[#allocation6 + $0x98] sm:$0xff]
    %v142 = vld [vmem:[#allocation6 + $0xa0] sm:$0xff]
    %v143 = vld [vmem:[#allocation6 + $0xa8] sm:$0xff]
    %v144 = vld [vmem:[#allocation6 + $0xb0] sm:$0xff]
    %v145 = vld [vmem:[#allocation6 + $0xb8] sm:$0xff]
    %v146 = vld [vmem:[#allocation6 + $0xc0] sm:$0xff]
    %v147 = vld [vmem:[#allocation6 + $0xc8] sm:$0xff]
    %v148 = vld [vmem:[#allocation6 + $0xd0] sm:$0xff]
    %v149 = vld [vmem:[#allocation6 + $0xd8] sm:$0xff]
    %v150 = vld [vmem:[#allocation6 + $0xe0] sm:$0xff]
    %v151 = vld [vmem:[#allocation6 + $0xe8] sm:$0xff]
    %v152 = vld [vmem:[#allocation6 + $0xf0] sm:$0xff]
    %v153 = vld [vmem:[#allocation6 + $0xf8] sm:$0xff]
    %v154 = vld [vmem:[#allocation6 + $0x100] sm:$0xff]
    %v155 = vld [vmem:[#allocation6 + $0x108] sm:$0xff]
    %v156 = vld [vmem:[#allocation6 + $0x110] sm:$0xff]
    %v157 = vld [vmem:[#allocation6 + $0x118] sm:$0xff]
    %v158 = vld [vmem:[#allocation6 + $0x120] sm:$0xff]
    %v159 = vld [vmem:[#allocation6 + $0x128] sm:$0xff]
    %v160 = vld [vmem:[#allocation6 + $0x130] sm:$0xff]
    %v161 = vld [vmem:[#allocation6 + $0x138] sm:$0xff]
    %v162 = vld [vmem:[#allocation6 + $0x140] sm:$0xff]
    %v163 = vld [vmem:[#allocation6 + $0x148] sm:$0xff]
    %v164 = vld [vmem:[#allocation6 + $0x150] sm:$0xff]
    %v165 = vld [vmem:[#allocation6 + $0x158] sm:$0xff]
    %v166 = vld [vmem:[#allocation6 + $0x160] sm:$0xff]
    %v167 = vld [vmem:[#allocation6 + $0x168] sm:$0xff]
    %v168 = vld [vmem:[#allocation6 + $0x170] sm:$0xff]
    %v169 = vld [vmem:[#allocation6 + $0x178] sm:$0xff]
    %v170 = vld [vmem:[#allocation6 + $0x180] sm:$0xff]
    %v171 = vld [vmem:[#allocation6 + $0x188] sm:$0xff]
    %v172 = vld [vmem:[#allocation6 + $0x190] sm:$0xff]
    %v173 = vld [vmem:[#allocation6 + $0x198] sm:$0xff]
    %v174 = vld [vmem:[#allocation6 + $0x1a0] sm:$0xff]
    %v175 = vld [vmem:[#allocation6 + $0x1a8] sm:$0xff]
    %v176 = vld [vmem:[#allocation6 + $0x1b0] sm:$0xff]
    %v177 = vld [vmem:[#allocation6 + $0x1b8] sm:$0xff]
    %v178 = vld [vmem:[#allocation6 + $0x1c0] sm:$0xff]
    %v179 = vld [vmem:[#allocation6 + $0x1c8] sm:$0xff]
    %v180 = vld [vmem:[#allocation6 + $0x1d0] sm:$0xff]
    %v181 = vld [vmem:[#allocation6 + $0x1d8] sm:$0xff]
    %v182 = vld [vmem:[#allocation6 + $0x1e0] sm:$0xff]
    %v183 = vld [vmem:[#allocation6 + $0x1e8] sm:$0xff]
    %v184 = vld [vmem:[#allocation6 + $0x1f0] sm:$0xff]
    %v185 = vld [vmem:[#allocation6 + $0x1f8] sm:$0xff]
    %v194 = vunpack.c.l.b16 %v114
    %v195 = vunpack.c.h.b16 %v114
    %v196 = vunpack.c.l.b16 %v115
    %v197 = vunpack.c.h.b16 %v115
    %v198 = vunpack.c.l.b16 %v116
    %v199 = vunpack.c.h.b16 %v116
    %v200 = vunpack.c.l.b16 %v117
    %v201 = vunpack.c.h.b16 %v117
    %v202 = vunpack.c.l.b16 %v118
    %v203 = vunpack.c.h.b16 %v118
    %v204 = vunpack.c.l.b16 %v119
    %v205 = vunpack.c.h.b16 %v119
    %v206 = vunpack.c.l.b16 %v120
    %v207 = vunpack.c.h.b16 %v120
    %v208 = vunpack.c.l.b16 %v121
    %v209 = vunpack.c.h.b16 %v121
    %v210 = vpack.c.b16 %v196, %v194
    %v211 = vpack.c.b16 %v197, %v195
    %v212 = vpack.c.b16 %v200, %v198
    %v213 = vpack.c.b16 %v201, %v199
    %v214 = vpack.c.b16 %v204, %v202
    %v215 = vpack.c.b16 %v205, %v203
    %v216 = vpack.c.b16 %v208, %v206
    %v217 = vpack.c.b16 %v209, %v207
    %v290 = vunpack.c.l.b16 %v122
    %v291 = vunpack.c.h.b16 %v122
    %v292 = vunpack.c.l.b16 %v123
    %v293 = vunpack.c.h.b16 %v123
    %v294 = vunpack.c.l.b16 %v124
    %v295 = vunpack.c.h.b16 %v124
    %v296 = vunpack.c.l.b16 %v125
    %v297 = vunpack.c.h.b16 %v125
    %v298 = vunpack.c.l.b16 %v126
    %v299 = vunpack.c.h.b16 %v126
    %v300 = vunpack.c.l.b16 %v127
    %v301 = vunpack.c.h.b16 %v127
    %v302 = vunpack.c.l.b16 %v128
    %v303 = vunpack.c.h.b16 %v128
    %v304 = vunpack.c.l.b16 %v129
    %v305 = vunpack.c.h.b16 %v129
    %v306 = vunpack.c.l.b16 %v130
    %v307 = vunpack.c.h.b16 %v130
    %v308 = vunpack.c.l.b16 %v131
    %v309 = vunpack.c.h.b16 %v131
    %v310 = vunpack.c.l.b16 %v132
    %v311 = vunpack.c.h.b16 %v132
    %v312 = vunpack.c.l.b16 %v133
    %v313 = vunpack.c.h.b16 %v133
    %v314 = vunpack.c.l.b16 %v134
    %v315 = vunpack.c.h.b16 %v134
    %v316 = vunpack.c.l.b16 %v135
    %v317 = vunpack.c.h.b16 %v135
    %v318 = vunpack.c.l.b16 %v136
    %v319 = vunpack.c.h.b16 %v136
    %v320 = vunpack.c.l.b16 %v137
    %v321 = vunpack.c.h.b16 %v137
    %v322 = vunpack.c.l.b16 %v138
    %v323 = vunpack.c.h.b16 %v138
    %v324 = vunpack.c.l.b16 %v139
    %v325 = vunpack.c.h.b16 %v139
    %v326 = vunpack.c.l.b16 %v140
    %v327 = vunpack.c.h.b16 %v140
    %v328 = vunpack.c.l.b16 %v141
    %v329 = vunpack.c.h.b16 %v141
    %v330 = vunpack.c.l.b16 %v142
    %v331 = vunpack.c.h.b16 %v142
    %v332 = vunpack.c.l.b16 %v143
    %v333 = vunpack.c.h.b16 %v143
    %v334 = vunpack.c.l.b16 %v144
    %v335 = vunpack.c.h.b16 %v144
    %v336 = vunpack.c.l.b16 %v145
    %v337 = vunpack.c.h.b16 %v145
    %v338 = vunpack.c.l.b16 %v146
    %v339 = vunpack.c.h.b16 %v146
    %v340 = vunpack.c.l.b16 %v147
    %v341 = vunpack.c.h.b16 %v147
    %v342 = vunpack.c.l.b16 %v148
    %v343 = vunpack.c.h.b16 %v148
    %v344 = vunpack.c.l.b16 %v149
    %v345 = vunpack.c.h.b16 %v149
    %v346 = vunpack.c.l.b16 %v150
    %v347 = vunpack.c.h.b16 %v150
    %v348 = vunpack.c.l.b16 %v151
    %v349 = vunpack.c.h.b16 %v151
    %v350 = vunpack.c.l.b16 %v152
    %v351 = vunpack.c.h.b16 %v152
    %v352 = vunpack.c.l.b16 %v153
    %v353 = vunpack.c.h.b16 %v153
    %v354 = vunpack.c.l.b16 %v154
    %v355 = vunpack.c.h.b16 %v154
    %v356 = vunpack.c.l.b16 %v155
    %v357 = vunpack.c.h.b16 %v155
    %v358 = vunpack.c.l.b16 %v156
    %v359 = vunpack.c.h.b16 %v156
    %v360 = vunpack.c.l.b16 %v157
    %v361 = vunpack.c.h.b16 %v157
    %v362 = vunpack.c.l.b16 %v158
    %v363 = vunpack.c.h.b16 %v158
    %v364 = vunpack.c.l.b16 %v159
    %v365 = vunpack.c.h.b16 %v159
    %v366 = vunpack.c.l.b16 %v160
    %v367 = vunpack.c.h.b16 %v160
    %v368 = vunpack.c.l.b16 %v161
    %v369 = vunpack.c.h.b16 %v161
    %v370 = vunpack.c.l.b16 %v162
    %v371 = vunpack.c.h.b16 %v162
    %v372 = vunpack.c.l.b16 %v163
    %v373 = vunpack.c.h.b16 %v163
    %v374 = vunpack.c.l.b16 %v164
    %v375 = vunpack.c.h.b16 %v164
    %v376 = vunpack.c.l.b16 %v165
    %v377 = vunpack.c.h.b16 %v165
    %v378 = vunpack.c.l.b16 %v166
    %v379 = vunpack.c.h.b16 %v166
    %v380 = vunpack.c.l.b16 %v167
    %v381 = vunpack.c.h.b16 %v167
    %v382 = vunpack.c.l.b16 %v168
    %v383 = vunpack.c.h.b16 %v168
    %v384 = vunpack.c.l.b16 %v169
    %v385 = vunpack.c.h.b16 %v169
    %v386 = vunpack.c.l.b16 %v170
    %v387 = vunpack.c.h.b16 %v170
    %v388 = vunpack.c.l.b16 %v171
    %v389 = vunpack.c.h.b16 %v171
    %v390 = vunpack.c.l.b16 %v172
    %v391 = vunpack.c.h.b16 %v172
    %v392 = vunpack.c.l.b16 %v173
    %v393 = vunpack.c.h.b16 %v173
    %v394 = vunpack.c.l.b16 %v174
    %v395 = vunpack.c.h.b16 %v174
    %v396 = vunpack.c.l.b16 %v175
    %v397 = vunpack.c.h.b16 %v175
    %v398 = vunpack.c.l.b16 %v176
    %v399 = vunpack.c.h.b16 %v176
    %v400 = vunpack.c.l.b16 %v177
    %v401 = vunpack.c.h.b16 %v177
    %v402 = vunpack.c.l.b16 %v178
    %v403 = vunpack.c.h.b16 %v178
    %v404 = vunpack.c.l.b16 %v179
    %v405 = vunpack.c.h.b16 %v179
    %v406 = vunpack.c.l.b16 %v180
    %v407 = vunpack.c.h.b16 %v180
    %v408 = vunpack.c.l.b16 %v181
    %v409 = vunpack.c.h.b16 %v181
    %v410 = vunpack.c.l.b16 %v182
    %v411 = vunpack.c.h.b16 %v182
    %v412 = vunpack.c.l.b16 %v183
    %v413 = vunpack.c.h.b16 %v183
    %v414 = vunpack.c.l.b16 %v184
    %v415 = vunpack.c.h.b16 %v184
    %v416 = vunpack.c.l.b16 %v185
    %v417 = vunpack.c.h.b16 %v185
    %v418 = vpack.c.b16 %v294, %v290
    %v419 = vpack.c.b16 %v295, %v291
    %v420 = vpack.c.b16 %v296, %v292
    %v421 = vpack.c.b16 %v297, %v293
    %v422 = vpack.c.b16 %v302, %v298
    %v423 = vpack.c.b16 %v303, %v299
    %v424 = vpack.c.b16 %v304, %v300
    %v425 = vpack.c.b16 %v305, %v301
    %v426 = vpack.c.b16 %v310, %v306
    %v427 = vpack.c.b16 %v311, %v307
    %v428 = vpack.c.b16 %v312, %v308
    %v429 = vpack.c.b16 %v313, %v309
    %v430 = vpack.c.b16 %v318, %v314
    %v431 = vpack.c.b16 %v319, %v315
    %v432 = vpack.c.b16 %v320, %v316
    %v433 = vpack.c.b16 %v321, %v317
    %v434 = vpack.c.b16 %v326, %v322
    %v435 = vpack.c.b16 %v327, %v323
    %v436 = vpack.c.b16 %v328, %v324
    %v437 = vpack.c.b16 %v329, %v325
    %v438 = vpack.c.b16 %v334, %v330
    %v439 = vpack.c.b16 %v335, %v331
    %v440 = vpack.c.b16 %v336, %v332
    %v441 = vpack.c.b16 %v337, %v333
    %v442 = vpack.c.b16 %v342, %v338
    %v443 = vpack.c.b16 %v343, %v339
    %v444 = vpack.c.b16 %v344, %v340
    %v445 = vpack.c.b16 %v345, %v341
    %v446 = vpack.c.b16 %v350, %v346
    %v447 = vpack.c.b16 %v351, %v347
    %v448 = vpack.c.b16 %v352, %v348
    %v449 = vpack.c.b16 %v353, %v349
    %v450 = vpack.c.b16 %v358, %v354
    %v451 = vpack.c.b16 %v359, %v355
    %v452 = vpack.c.b16 %v360, %v356
    %v453 = vpack.c.b16 %v361, %v357
    %v454 = vpack.c.b16 %v366, %v362
    %v455 = vpack.c.b16 %v367, %v363
    %v456 = vpack.c.b16 %v368, %v364
    %v457 = vpack.c.b16 %v369, %v365
    %v458 = vpack.c.b16 %v374, %v370
    %v459 = vpack.c.b16 %v375, %v371
    %v460 = vpack.c.b16 %v376, %v372
    %v461 = vpack.c.b16 %v377, %v373
    %v462 = vpack.c.b16 %v382, %v378
    %v463 = vpack.c.b16 %v383, %v379
    %v464 = vpack.c.b16 %v384, %v380
    %v465 = vpack.c.b16 %v385, %v381
    %v466 = vpack.c.b16 %v390, %v386
    %v467 = vpack.c.b16 %v391, %v387
    %v468 = vpack.c.b16 %v392, %v388
    %v469 = vpack.c.b16 %v393, %v389
    %v470 = vpack.c.b16 %v398, %v394
    %v471 = vpack.c.b16 %v399, %v395
    %v472 = vpack.c.b16 %v400, %v396
    %v473 = vpack.c.b16 %v401, %v397
    %v474 = vpack.c.b16 %v406, %v402
    %v475 = vpack.c.b16 %v407, %v403
    %v476 = vpack.c.b16 %v408, %v404
    %v477 = vpack.c.b16 %v409, %v405
    %v478 = vpack.c.b16 %v414, %v410
    %v479 = vpack.c.b16 %v415, %v411
    %v480 = vpack.c.b16 %v416, %v412
    %v481 = vpack.c.b16 %v417, %v413
    %546 = vmatprep.subr.bf16.mxu0 %v419
    %547 = vmatpush1.bf16.msra.mxu0 %v418
    %548 = vmatprep.subr.bf16.mxu0 %v423
    %549 = vmatpush1.bf16.msra.mxu0 %v422
    %550 = vmatprep.subr.bf16.mxu0 %v427
    %551 = vmatpush1.bf16.msra.mxu0 %v426
    %552 = vmatprep.subr.bf16.mxu0 %v431
    %553 = vmatpush1.bf16.msra.mxu0 %v430
    %554 = vmatprep.subr.bf16.mxu0 %v435
    %555 = vmatpush1.bf16.msra.mxu0 %v434
    %556 = vmatprep.subr.bf16.mxu0 %v439
    %557 = vmatpush1.bf16.msra.mxu0 %v438
    %558 = vmatprep.subr.bf16.mxu0 %v443
    %559 = vmatpush1.bf16.msra.mxu0 %v442
    %560 = vmatprep.subr.bf16.mxu0 %v447
    %561 = vmatpush1.bf16.msra.mxu0 %v446
    %562 = vmatprep.subr.bf16.mxu0 %v451
    %563 = vmatpush1.bf16.msra.mxu0 %v450
    %564 = vmatprep.subr.bf16.mxu0 %v455
    %565 = vmatpush1.bf16.msra.mxu0 %v454
    %566 = vmatprep.subr.bf16.mxu0 %v459
    %567 = vmatpush1.bf16.msra.mxu0 %v458
    %568 = vmatprep.subr.bf16.mxu0 %v463
    %569 = vmatpush1.bf16.msra.mxu0 %v462
    %570 = vmatprep.subr.bf16.mxu0 %v467
    %571 = vmatpush1.bf16.msra.mxu0 %v466
    %572 = vmatprep.subr.bf16.mxu0 %v471
    %573 = vmatpush1.bf16.msra.mxu0 %v470
    %574 = vmatprep.subr.bf16.mxu0 %v475
    %575 = vmatpush1.bf16.msra.mxu0 %v474
    %576 = vmatprep.subr.bf16.mxu0 %v479
    %577 = vmatpush1.bf16.msra.mxu0 %v478
    %578 = vmatprep.mubr.bf16.mxu0 %v211
    %579 = vmatmul.mubr.bf16.gmra.mrb[0].mxu0 %v210
    %v580 = vpop.f32.mrb[0].mxu0
    %v581 = vadd.f32 0.0, %v580
    %v582 = vpop.f32.mrb[0].mxu0
    %v583 = vadd.f32 0.0, %v582
    %v584 = vpop.f32.mrb[0].mxu0
    %v585 = vadd.f32 0.0, %v584
    %v586 = vpop.f32.mrb[0].mxu0
    %v587 = vadd.f32 0.0, %v586
    %588 = vmatprep.mubr.bf16.mxu0 %v213
    %589 = vmatmul.mubr.bf16.gmra.mrb[0].mxu0 %v212
    %v590 = vpop.f32.mrb[0].mxu0
    %v591 = vadd.f32 0.0, %v590
    %v592 = vpop.f32.mrb[0].mxu0
    %v593 = vadd.f32 0.0, %v592
    %v594 = vpop.f32.mrb[0].mxu0
    %v595 = vadd.f32 0.0, %v594
    %v596 = vpop.f32.mrb[0].mxu0
    %v597 = vadd.f32 0.0, %v596
    %598 = vmatprep.mubr.bf16.mxu0 %v215
    %599 = vmatmul.mubr.bf16.gmra.mrb[0].mxu0 %v214
    %v600 = vpop.f32.mrb[0].mxu0
    %v601 = vadd.f32 0.0, %v600
    %v602 = vpop.f32.mrb[0].mxu0
    %v603 = vadd.f32 0.0, %v602
    %v604 = vpop.f32.mrb[0].mxu0
    %v605 = vadd.f32 0.0, %v604
    %v606 = vpop.f32.mrb[0].mxu0
    %v607 = vadd.f32 0.0, %v606
    %608 = vmatprep.mubr.bf16.mxu0 %v217
    %609 = vmatmul.mubr.bf16.gmra.mrb[0].mxu0 %v216
    %v610 = vpop.f32.mrb[0].mxu0
    %v611 = vadd.f32 0.0, %v610
    %v612 = vpop.f32.mrb[0].mxu0
    %v613 = vadd.f32 0.0, %v612
    %v614 = vpop.f32.mrb[0].mxu0
    %v615 = vadd.f32 0.0, %v614
    %v616 = vpop.f32.mrb[0].mxu0
    %v617 = vadd.f32 0.0, %v616
    %618 = vdwg.mxu0
    %619 = vmatprep.subr.bf16.mxu0 %v421
    %620 = vmatpush1.bf16.msra.mxu0 %v420
    %621 = vmatprep.subr.bf16.mxu0 %v425
    %622 = vmatpush1.bf16.msra.mxu0 %v424
    %623 = vmatprep.subr.bf16.mxu0 %v429
    %624 = vmatpush1.bf16.msra.mxu0 %v428
    %625 = vmatprep.subr.bf16.mxu0 %v433
    %626 = vmatpush1.bf16.msra.mxu0 %v432
    %627 = vmatprep.subr.bf16.mxu0 %v437
    %628 = vmatpush1.bf16.msra.mxu0 %v436
    %629 = vmatprep.subr.bf16.mxu0 %v441
    %630 = vmatpush1.bf16.msra.mxu0 %v440
    %631 = vmatprep.subr.bf16.mxu0 %v445
    %632 = vmatpush1.bf16.msra.mxu0 %v444
    %633 = vmatprep.subr.bf16.mxu0 %v449
    %634 = vmatpush1.bf16.msra.mxu0 %v448
    %635 = vmatprep.subr.bf16.mxu0 %v453
    %636 = vmatpush1.bf16.msra.mxu0 %v452
    %637 = vmatprep.subr.bf16.mxu0 %v457
    %638 = vmatpush1.bf16.msra.mxu0 %v456
    %639 = vmatprep.subr.bf16.mxu0 %v461
    %640 = vmatpush1.bf16.msra.mxu0 %v460
    %641 = vmatprep.subr.bf16.mxu0 %v465
    %642 = vmatpush1.bf16.msra.mxu0 %v464
    %643 = vmatprep.subr.bf16.mxu0 %v469
    %644 = vmatpush1.bf16.msra.mxu0 %v468
    %645 = vmatprep.subr.bf16.mxu0 %v473
    %646 = vmatpush1.bf16.msra.mxu0 %v472
    %647 = vmatprep.subr.bf16.mxu0 %v477
    %648 = vmatpush1.bf16.msra.mxu0 %v476
    %649 = vmatprep.subr.bf16.mxu0 %v481
    %650 = vmatpush1.bf16.msra.mxu0 %v480
    %651 = vmatprep.mubr.bf16.mxu0 %v211
    %652 = vmatmul.mubr.bf16.gmra.mrb[0].mxu0 %v210
    %v653 = vpop.f32.mrb[0].mxu0
    %v654 = vadd.f32 0.0, %v653
    %v655 = vpop.f32.mrb[0].mxu0
    %v656 = vadd.f32 0.0, %v655
    %v657 = vpop.f32.mrb[0].mxu0
    %v658 = vadd.f32 0.0, %v657
    %v659 = vpop.f32.mrb[0].mxu0
    %v660 = vadd.f32 0.0, %v659
    %661 = vmatprep.mubr.bf16.mxu0 %v213
    %662 = vmatmul.mubr.bf16.gmra.mrb[0].mxu0 %v212
    %v663 = vpop.f32.mrb[0].mxu0
    %v664 = vadd.f32 0.0, %v663
    %v665 = vpop.f32.mrb[0].mxu0
    %v666 = vadd.f32 0.0, %v665
    %v667 = vpop.f32.mrb[0].mxu0
    %v668 = vadd.f32 0.0, %v667
    %v669 = vpop.f32.mrb[0].mxu0
    %v670 = vadd.f32 0.0, %v669
    %671 = vmatprep.mubr.bf16.mxu0 %v215
    %672 = vmatmul.mubr.bf16.gmra.mrb[0].mxu0 %v214
    %v673 = vpop.f32.mrb[0].mxu0
    %v674 = vadd.f32 0.0, %v673
    %v675 = vpop.f32.mrb[0].mxu0
    %v676 = vadd.f32 0.0, %v675
    %v677 = vpop.f32.mrb[0].mxu0
    %v678 = vadd.f32 0.0, %v677
    %v679 = vpop.f32.mrb[0].mxu0
    %v680 = vadd.f32 0.0, %v679
    %681 = vmatprep.mubr.bf16.mxu0 %v217
    %682 = vmatmul.mubr.bf16.gmra.mrb[0].mxu0 %v216
    %v683 = vpop.f32.mrb[0].mxu0
    %v684 = vadd.f32 0.0, %v683
    %v685 = vpop.f32.mrb[0].mxu0
    %v686 = vadd.f32 0.0, %v685
    %v687 = vpop.f32.mrb[0].mxu0
    %v688 = vadd.f32 0.0, %v687
    %v689 = vpop.f32.mrb[0].mxu0
    %v690 = vadd.f32 0.0, %v689
    %691 = vdwg.mxu0
    %v692 = vadd.f32 %v82, %v581
    %v693 = vadd.f32 %v83, %v583
    %v694 = vadd.f32 %v84, %v654
    %v695 = vadd.f32 %v85, %v656
    %v696 = vadd.f32 %v86, %v585
    %v697 = vadd.f32 %v87, %v587
    %v698 = vadd.f32 %v88, %v658
    %v699 = vadd.f32 %v89, %v660
    %v700 = vadd.f32 %v90, %v591
    %v701 = vadd.f32 %v91, %v593
    %v702 = vadd.f32 %v92, %v664
    %v703 = vadd.f32 %v93, %v666
    %v704 = vadd.f32 %v94, %v595
    %v705 = vadd.f32 %v95, %v597
    %v706 = vadd.f32 %v96, %v668
    %v707 = vadd.f32 %v97, %v670
    %v708 = vadd.f32 %v98, %v601
    %v709 = vadd.f32 %v99, %v603
    %v710 = vadd.f32 %v100, %v674
    %v711 = vadd.f32 %v101, %v676
    %v712 = vadd.f32 %v102, %v605
    %v713 = vadd.f32 %v103, %v607
    %v714 = vadd.f32 %v104, %v678
    %v715 = vadd.f32 %v105, %v680
    %v716 = vadd.f32 %v106, %v611
    %v717 = vadd.f32 %v107, %v613
    %v718 = vadd.f32 %v108, %v684
    %v719 = vadd.f32 %v109, %v686
    %v720 = vadd.f32 %v110, %v615
    %v721 = vadd.f32 %v111, %v617
    %v722 = vadd.f32 %v112, %v688
    %v723 = vadd.f32 %v113, %v690
    %724 = vst [vmem:[#allocation2] sm:$0xff] %v692
    %725 = vst [vmem:[#allocation2 + $0x8] sm:$0xff] %v693
    %726 = vst [vmem:[#allocation2 + $0x10] sm:$0xff] %v694
    %727 = vst [vmem:[#allocation2 + $0x18] sm:$0xff] %v695
    %728 = vst [vmem:[#allocation2 + $0x20] sm:$0xff] %v696
    %729 = vst [vmem:[#allocation2 + $0x28] sm:$0xff] %v697
    %730 = vst [vmem:[#allocation2 + $0x30] sm:$0xff] %v698
    %731 = vst [vmem:[#allocation2 + $0x38] sm:$0xff] %v699
    %732 = vst [vmem:[#allocation2 + $0x40] sm:$0xff] %v700
    %733 = vst [vmem:[#allocation2 + $0x48] sm:$0xff] %v701
    %734 = vst [vmem:[#allocation2 + $0x50] sm:$0xff] %v702
    %735 = vst [vmem:[#allocation2 + $0x58] sm:$0xff] %v703
    %736 = vst [vmem:[#allocation2 + $0x60] sm:$0xff] %v704
    %737 = vst [vmem:[#allocation2 + $0x68] sm:$0xff] %v705
    %738 = vst [vmem:[#allocation2 + $0x70] sm:$0xff] %v706
    %739 = vst [vmem:[#allocation2 + $0x78] sm:$0xff] %v707
    %740 = vst [vmem:[#allocation2 + $0x80] sm:$0xff] %v708
    %741 = vst [vmem:[#allocation2 + $0x88] sm:$0xff] %v709
    %742 = vst [vmem:[#allocation2 + $0x90] sm:$0xff] %v710
    %743 = vst [vmem:[#allocation2 + $0x98] sm:$0xff] %v711
    %744 = vst [vmem:[#allocation2 + $0xa0] sm:$0xff] %v712
    %745 = vst [vmem:[#allocation2 + $0xa8] sm:$0xff] %v713
    %746 = vst [vmem:[#allocation2 + $0xb0] sm:$0xff] %v714
    %747 = vst [vmem:[#allocation2 + $0xb8] sm:$0xff] %v715
    %748 = vst [vmem:[#allocation2 + $0xc0] sm:$0xff] %v716
    %749 = vst [vmem:[#allocation2 + $0xc8] sm:$0xff] %v717
    %750 = vst [vmem:[#allocation2 + $0xd0] sm:$0xff] %v718
    %751 = vst [vmem:[#allocation2 + $0xd8] sm:$0xff] %v719
    %752 = vst [vmem:[#allocation2 + $0xe0] sm:$0xff] %v720
    %753 = vst [vmem:[#allocation2 + $0xe8] sm:$0xff] %v721
    %754 = vst [vmem:[#allocation2 + $0xf0] sm:$0xff] %v722
    %755 = vst [vmem:[#allocation2 + $0xf8] sm:$0xff] %v723
    // Predicated region
    $region30: #{tpu_custom_call.1} parent=1 // pred_check
      %p756 = pneg %p46
    $region31: #{tpu_custom_call.1} parent=1 // pred_check_branch
      %758 = sbr.rel (%p756) target = $region33
    $region32: #{tpu_custom_call.1} parent=1 // pred_region
      %v759 = vld [vmem:[#allocation2] sm:$0xff]
      %v760 = vld [vmem:[#allocation2 + $0x8] sm:$0xff]
      %v761 = vld [vmem:[#allocation2 + $0x10] sm:$0xff]
      %v762 = vld [vmem:[#allocation2 + $0x18] sm:$0xff]
      %v763 = vld [vmem:[#allocation2 + $0x20] sm:$0xff]
      %v764 = vld [vmem:[#allocation2 + $0x28] sm:$0xff]
      %v765 = vld [vmem:[#allocation2 + $0x30] sm:$0xff]
      %v766 = vld [vmem:[#allocation2 + $0x38] sm:$0xff]
      %v767 = vld [vmem:[#allocation2 + $0x40] sm:$0xff]
      %v768 = vld [vmem:[#allocation2 + $0x48] sm:$0xff]
      %v769 = vld [vmem:[#allocation2 + $0x50] sm:$0xff]
      %v770 = vld [vmem:[#allocation2 + $0x58] sm:$0xff]
      %v771 = vld [vmem:[#allocation2 + $0x60] sm:$0xff]
      %v772 = vld [vmem:[#allocation2 + $0x68] sm:$0xff]
      %v773 = vld [vmem:[#allocation2 + $0x70] sm:$0xff]
      %v774 = vld [vmem:[#allocation2 + $0x78] sm:$0xff]
      %v775 = vld [vmem:[#allocation2 + $0x80] sm:$0xff]
      %v776 = vld [vmem:[#allocation2 + $0x88] sm:$0xff]
      %v777 = vld [vmem:[#allocation2 + $0x90] sm:$0xff]
      %v778 = vld [vmem:[#allocation2 + $0x98] sm:$0xff]
      %v779 = vld [vmem:[#allocation2 + $0xa0] sm:$0xff]
      %v780 = vld [vmem:[#allocation2 + $0xa8] sm:$0xff]
      %v781 = vld [vmem:[#allocation2 + $0xb0] sm:$0xff]
      %v782 = vld [vmem:[#allocation2 + $0xb8] sm:$0xff]
      %v783 = vld [vmem:[#allocation2 + $0xc0] sm:$0xff]
      %v784 = vld [vmem:[#allocation2 + $0xc8] sm:$0xff]
      %v785 = vld [vmem:[#allocation2 + $0xd0] sm:$0xff]
      %v786 = vld [vmem:[#allocation2 + $0xd8] sm:$0xff]
      %v787 = vld [vmem:[#allocation2 + $0xe0] sm:$0xff]
      %v788 = vld [vmem:[#allocation2 + $0xe8] sm:$0xff]
      %v789 = vld [vmem:[#allocation2 + $0xf0] sm:$0xff]
      %v790 = vld [vmem:[#allocation2 + $0xf8] sm:$0xff]
      %v791 = vadd.f32 %v759, %v763
      %v792 = vadd.f32 %v791, %v767
      %v793 = vadd.f32 %v792, %v771
      %v794 = vadd.f32 %v793, %v775
      %v795 = vadd.f32 %v794, %v779
      %v796 = vadd.f32 %v795, %v783
      %v797 = vadd.f32 %v796, %v787
      %v798 = vrot.slane %v797, 4
      %v799 = vadd.f32 %v797, %v798
      %v800 = vrot.slane %v799, 2
      %v801 = vadd.f32 %v799, %v800
      %v802 = vrot.slane %v801, 1
      %v803 = vadd.f32 %v801, %v802
      %v804 = vadd.f32 %v760, %v764
      %v805 = vadd.f32 %v804, %v768
      %v806 = vadd.f32 %v805, %v772
      %v807 = vadd.f32 %v806, %v776
      %v808 = vadd.f32 %v807, %v780
      %v809 = vadd.f32 %v808, %v784
      %v810 = vadd.f32 %v809, %v788
      %v811 = vrot.slane %v810, 4
      %v812 = vadd.f32 %v810, %v811
      %v813 = vrot.slane %v812, 2
      %v814 = vadd.f32 %v812, %v813
      %v815 = vrot.slane %v814, 1
      %v816 = vadd.f32 %v814, %v815
      %v817 = vadd.f32 %v761, %v765
      %v818 = vadd.f32 %v817, %v769
      %v819 = vadd.f32 %v818, %v773
      %v820 = vadd.f32 %v819, %v777
      %v821 = vadd.f32 %v820, %v781
      %v822 = vadd.f32 %v821, %v785
      %v823 = vadd.f32 %v822, %v789
      %v824 = vrot.slane %v823, 4
      %v825 = vadd.f32 %v823, %v824
      %v826 = vrot.slane %v825, 2
      %v827 = vadd.f32 %v825, %v826
      %v828 = vrot.slane %v827, 1
      %v829 = vadd.f32 %v827, %v828
      %v830 = vadd.f32 %v762, %v766
      %v831 = vadd.f32 %v830, %v770
      %v832 = vadd.f32 %v831, %v774
      %v833 = vadd.f32 %v832, %v778
      %v834 = vadd.f32 %v833, %v782
      %v835 = vadd.f32 %v834, %v786
      %v836 = vadd.f32 %v835, %v790
      %v837 = vrot.slane %v836, 4
      %v838 = vadd.f32 %v836, %v837
      %v839 = vrot.slane %v838, 2
      %v840 = vadd.f32 %v838, %v839
      %v841 = vrot.slane %v840, 1
      %v842 = vadd.f32 %v840, %v841
      %v843 = vrcp.pop 64.0
      %v844 = vmul.f32 %v803, %v843
      %v845 = vmul.f32 %v816, %v843
      %v846 = vmul.f32 %v829, %v843
      %v847 = vmul.f32 %v842, %v843
      %v848 = vsub.f32 %v759, %v844
      %v849 = vsub.f32 %v760, %v845
      %v850 = vsub.f32 %v761, %v846
      %v851 = vsub.f32 %v762, %v847
      %v852 = vsub.f32 %v763, %v844
      %v853 = vsub.f32 %v764, %v845
      %v854 = vsub.f32 %v765, %v846
      %v855 = vsub.f32 %v766, %v847
      %v856 = vsub.f32 %v767, %v844
      %v857 = vsub.f32 %v768, %v845
      %v858 = vsub.f32 %v769, %v846
      %v859 = vsub.f32 %v770, %v847
      %v860 = vsub.f32 %v771, %v844
      %v861 = vsub.f32 %v772, %v845
      %v862 = vsub.f32 %v773, %v846
      %v863 = vsub.f32 %v774, %v847
      %v864 = vsub.f32 %v775, %v844
      %v865 = vsub.f32 %v776, %v845
      %v866 = vsub.f32 %v777, %v846
      %v867 = vsub.f32 %v778, %v847
      %v868 = vsub.f32 %v779, %v844
      %v869 = vsub.f32 %v780, %v845
      %v870 = vsub.f32 %v781, %v846
      %v871 = vsub.f32 %v782, %v847
      %v872 = vsub.f32 %v783, %v844
      %v873 = vsub.f32 %v784, %v845
      %v874 = vsub.f32 %v785, %v846
      %v875 = vsub.f32 %v786, %v847
      %v876 = vsub.f32 %v787, %v844
      %v877 = vsub.f32 %v788, %v845
      %v878 = vsub.f32 %v789, %v846
      %v879 = vsub.f32 %v790, %v847
      %v880 = vmul.f32 %v848, %v848
      %v881 = vmul.f32 %v849, %v849
      %v882 = vmul.f32 %v850, %v850
      %v883 = vmul.f32 %v851, %v851
      %v884 = vmul.f32 %v852, %v852
      %v885 = vmul.f32 %v853, %v853
      %v886 = vmul.f32 %v854, %v854
      %v887 = vmul.f32 %v855, %v855
      %v888 = vmul.f32 %v856, %v856
      %v889 = vmul.f32 %v857, %v857
      %v890 = vmul.f32 %v858, %v858
      %v891 = vmul.f32 %v859, %v859
      %v892 = vmul.f32 %v860, %v860
      %v893 = vmul.f32 %v861, %v861
      %v894 = vmul.f32 %v862, %v862
      %v895 = vmul.f32 %v863, %v863
      %v896 = vmul.f32 %v864, %v864
      %v897 = vmul.f32 %v865, %v865
      %v898 = vmul.f32 %v866, %v866
      %v899 = vmul.f32 %v867, %v867
      %v900 = vmul.f32 %v868, %v868
      %v901 = vmul.f32 %v869, %v869
      %v902 = vmul.f32 %v870, %v870
      %v903 = vmul.f32 %v871, %v871
      %v904 = vmul.f32 %v872, %v872
      %v905 = vmul.f32 %v873, %v873
      %v906 = vmul.f32 %v874, %v874
      %v907 = vmul.f32 %v875, %v875
      %v908 = vmul.f32 %v876, %v876
      %v909 = vmul.f32 %v877, %v877
      %v910 = vmul.f32 %v878, %v878
      %v911 = vmul.f32 %v879, %v879
      %v912 = vadd.f32 %v880, %v884
      %v913 = vadd.f32 %v912, %v888
      %v914 = vadd.f32 %v913, %v892
      %v915 = vadd.f32 %v914, %v896
      %v916 = vadd.f32 %v915, %v900
      %v917 = vadd.f32 %v916, %v904
      %v918 = vadd.f32 %v917, %v908
      %v919 = vrot.slane %v918, 4
      %v920 = vadd.f32 %v918, %v919
      %v921 = vrot.slane %v920, 2
      %v922 = vadd.f32 %v920, %v921
      %v923 = vrot.slane %v922, 1
      %v924 = vadd.f32 %v922, %v923
      %v925 = vadd.f32 %v881, %v885
      %v926 = vadd.f32 %v925, %v889
      %v927 = vadd.f32 %v926, %v893
      %v928 = vadd.f32 %v927, %v897
      %v929 = vadd.f32 %v928, %v901
      %v930 = vadd.f32 %v929, %v905
      %v931 = vadd.f32 %v930, %v909
      %v932 = vrot.slane %v931, 4
      %v933 = vadd.f32 %v931, %v932
      %v934 = vrot.slane %v933, 2
      %v935 = vadd.f32 %v933, %v934
      %v936 = vrot.slane %v935, 1
      %v937 = vadd.f32 %v935, %v936
      %v938 = vadd.f32 %v882, %v886
      %v939 = vadd.f32 %v938, %v890
      %v940 = vadd.f32 %v939, %v894
      %v941 = vadd.f32 %v940, %v898
      %v942 = vadd.f32 %v941, %v902
      %v943 = vadd.f32 %v942, %v906
      %v944 = vadd.f32 %v943, %v910
      %v945 = vrot.slane %v944, 4
      %v946 = vadd.f32 %v944, %v945
      %v947 = vrot.slane %v946, 2
      %v948 = vadd.f32 %v946, %v947
      %v949 = vrot.slane %v948, 1
      %v950 = vadd.f32 %v948, %v949
      %v951 = vadd.f32 %v883, %v887
      %v952 = vadd.f32 %v951, %v891
      %v953 = vadd.f32 %v952, %v895
      %v954 = vadd.f32 %v953, %v899
      %v955 = vadd.f32 %v954, %v903
      %v956 = vadd.f32 %v955, %v907
      %v957 = vadd.f32 %v956, %v911
      %v958 = vrot.slane %v957, 4
      %v959 = vadd.f32 %v957, %v958
      %v960 = vrot.slane %v959, 2
      %v961 = vadd.f32 %v959, %v960
      %v962 = vrot.slane %v961, 1
      %v963 = vadd.f32 %v961, %v962
      %v964 = vmul.f32 %v924, %v843
      %v965 = vmul.f32 %v937, %v843
      %v966 = vmul.f32 %v950, %v843
      %v967 = vmul.f32 %v963, %v843
      %v968 = vadd.f32 %v964, 1e-05
      %v969 = vadd.f32 %v965, 1e-05
      %v970 = vadd.f32 %v966, 1e-05
      %v971 = vadd.f32 %v967, 1e-05
      %v972 = vrsqrt.pop %v968
      %v973 = vrsqrt.pop %v969
      %v974 = vrsqrt.pop %v970
      %v975 = vrsqrt.pop %v971
      %v976 = vmul.f32 %v848, %v972
      %v977 = vmul.f32 %v849, %v973
      %v978 = vmul.f32 %v850, %v974
      %v979 = vmul.f32 %v851, %v975
      %v980 = vmul.f32 %v852, %v972
      %v981 = vmul.f32 %v853, %v973
      %v982 = vmul.f32 %v854, %v974
      %v983 = vmul.f32 %v855, %v975
      %v984 = vmul.f32 %v856, %v972
      %v985 = vmul.f32 %v857, %v973
      %v986 = vmul.f32 %v858, %v974
      %v987 = vmul.f32 %v859, %v975
      %v988 = vmul.f32 %v860, %v972
      %v989 = vmul.f32 %v861, %v973
      %v990 = vmul.f32 %v862, %v974
      %v991 = vmul.f32 %v863, %v975
      %v992 = vmul.f32 %v864, %v972
      %v993 = vmul.f32 %v865, %v973
      %v994 = vmul.f32 %v866, %v974
      %v995 = vmul.f32 %v867, %v975
      %v996 = vmul.f32 %v868, %v972
      %v997 = vmul.f32 %v869, %v973
      %v998 = vmul.f32 %v870, %v974
      %v999 = vmul.f32 %v871, %v975
      %v1000 = vmul.f32 %v872, %v972
      %v1001 = vmul.f32 %v873, %v973
      %v1002 = vmul.f32 %v874, %v974
      %v1003 = vmul.f32 %v875, %v975
      %v1004 = vmul.f32 %v876, %v972
      %v1005 = vmul.f32 %v877, %v973
      %v1006 = vmul.f32 %v878, %v974
      %v1007 = vmul.f32 %v879, %v975
      %v1008 = vld [vmem:[%s2] sm:$0xf]
      %v1010 = vlaneseq
      %v1011 = vshrl.u32 %v1010, 7
      %v1012 = vsub.s32 0, %v1011
      %v1013 = vrot.slane %v1008, %v1012
      %v1014 = vlaneseq
      %v1015 = vshrl.u32 %v1014, 7
      %v1016 = vsub.s32 1, %v1015
      %v1017 = vrot.slane %v1008, %v1016
      %v1018 = vlaneseq
      %v1019 = vshrl.u32 %v1018, 7
      %v1020 = vsub.s32 2, %v1019
      %v1021 = vrot.slane %v1008, %v1020
      %v1022 = vlaneseq
      %v1023 = vshrl.u32 %v1022, 7
      %v1024 = vsub.s32 3, %v1023
      %v1025 = vrot.slane %v1008, %v1024
      %v1030 = vmul.f32 %v976, %v1013
      %v1031 = vmul.f32 %v977, %v1017
      %v1032 = vmul.f32 %v978, %v1021
      %v1033 = vmul.f32 %v979, %v1025
      %v1034 = vmul.f32 %v980, %v1013
      %v1035 = vmul.f32 %v981, %v1017
      %v1036 = vmul.f32 %v982, %v1021
      %v1037 = vmul.f32 %v983, %v1025
      %v1038 = vmul.f32 %v984, %v1013
      %v1039 = vmul.f32 %v985, %v1017
      %v1040 = vmul.f32 %v986, %v1021
      %v1041 = vmul.f32 %v987, %v1025
      %v1042 = vmul.f32 %v988, %v1013
      %v1043 = vmul.f32 %v989, %v1017
      %v1044 = vmul.f32 %v990, %v1021
      %v1045 = vmul.f32 %v991, %v1025
      %v1046 = vmul.f32 %v992, %v1013
      %v1047 = vmul.f32 %v993, %v1017
      %v1048 = vmul.f32 %v994, %v1021
      %v1049 = vmul.f32 %v995, %v1025
      %v1050 = vmul.f32 %v996, %v1013
      %v1051 = vmul.f32 %v997, %v1017
      %v1052 = vmul.f32 %v998, %v1021
      %v1053 = vmul.f32 %v999, %v1025
      %v1054 = vmul.f32 %v1000, %v1013
      %v1055 = vmul.f32 %v1001, %v1017
      %v1056 = vmul.f32 %v1002, %v1021
      %v1057 = vmul.f32 %v1003, %v1025
      %v1058 = vmul.f32 %v1004, %v1013
      %v1059 = vmul.f32 %v1005, %v1017
      %v1060 = vmul.f32 %v1006, %v1021
      %v1061 = vmul.f32 %v1007, %v1025
      %v1062 = vld [vmem:[%s3] sm:$0xf]
      %v1064 = vlaneseq
      %v1065 = vshrl.u32 %v1064, 7
      %v1066 = vsub.s32 0, %v1065
      %v1067 = vrot.slane %v1062, %v1066
      %v1068 = vlaneseq
      %v1069 = vshrl.u32 %v1068, 7
      %v1070 = vsub.s32 1, %v1069
      %v1071 = vrot.slane %v1062, %v1070
      %v1072 = vlaneseq
      %v1073 = vshrl.u32 %v1072, 7
      %v1074 = vsub.s32 2, %v1073
      %v1075 = vrot.slane %v1062, %v1074
      %v1076 = vlaneseq
      %v1077 = vshrl.u32 %v1076, 7
      %v1078 = vsub.s32 3, %v1077
      %v1079 = vrot.slane %v1062, %v1078
      %v1084 = vadd.f32 %v1030, %v1067
      %v1085 = vadd.f32 %v1031, %v1071
      %v1086 = vadd.f32 %v1032, %v1075
      %v1087 = vadd.f32 %v1033, %v1079
      %v1088 = vadd.f32 %v1034, %v1067
      %v1089 = vadd.f32 %v1035, %v1071
      %v1090 = vadd.f32 %v1036, %v1075
      %v1091 = vadd.f32 %v1037, %v1079
      %v1092 = vadd.f32 %v1038, %v1067
      %v1093 = vadd.f32 %v1039, %v1071
      %v1094 = vadd.f32 %v1040, %v1075
      %v1095 = vadd.f32 %v1041, %v1079
      %v1096 = vadd.f32 %v1042, %v1067
      %v1097 = vadd.f32 %v1043, %v1071
      %v1098 = vadd.f32 %v1044, %v1075
      %v1099 = vadd.f32 %v1045, %v1079
      %v1100 = vadd.f32 %v1046, %v1067
      %v1101 = vadd.f32 %v1047, %v1071
      %v1102 = vadd.f32 %v1048, %v1075
      %v1103 = vadd.f32 %v1049, %v1079
      %v1104 = vadd.f32 %v1050, %v1067
      %v1105 = vadd.f32 %v1051, %v1071
      %v1106 = vadd.f32 %v1052, %v1075
      %v1107 = vadd.f32 %v1053, %v1079
      %v1108 = vadd.f32 %v1054, %v1067
      %v1109 = vadd.f32 %v1055, %v1071
      %v1110 = vadd.f32 %v1056, %v1075
      %v1111 = vadd.f32 %v1057, %v1079
      %v1112 = vadd.f32 %v1058, %v1067
      %v1113 = vadd.f32 %v1059, %v1071
      %v1114 = vadd.f32 %v1060, %v1075
      %v1115 = vadd.f32 %v1061, %v1079
      %v1116 = vmul.f32 %v1084, 0.2
      %v1117 = vmul.f32 %v1085, 0.2
      %v1118 = vmul.f32 %v1086, 0.2
      %v1119 = vmul.f32 %v1087, 0.2
      %v1120 = vmul.f32 %v1088, 0.2
      %v1121 = vmul.f32 %v1089, 0.2
      %v1122 = vmul.f32 %v1090, 0.2
      %v1123 = vmul.f32 %v1091, 0.2
      %v1124 = vmul.f32 %v1092, 0.2
      %v1125 = vmul.f32 %v1093, 0.2
      %v1126 = vmul.f32 %v1094, 0.2
      %v1127 = vmul.f32 %v1095, 0.2
      %v1128 = vmul.f32 %v1096, 0.2
      %v1129 = vmul.f32 %v1097, 0.2
      %v1130 = vmul.f32 %v1098, 0.2
      %v1131 = vmul.f32 %v1099, 0.2
      %v1132 = vmul.f32 %v1100, 0.2
      %v1133 = vmul.f32 %v1101, 0.2
      %v1134 = vmul.f32 %v1102, 0.2
      %v1135 = vmul.f32 %v1103, 0.2
      %v1136 = vmul.f32 %v1104, 0.2
      %v1137 = vmul.f32 %v1105, 0.2
      %v1138 = vmul.f32 %v1106, 0.2
      %v1139 = vmul.f32 %v1107, 0.2
      %v1140 = vmul.f32 %v1108, 0.2
      %v1141 = vmul.f32 %v1109, 0.2
      %v1142 = vmul.f32 %v1110, 0.2
      %v1143 = vmul.f32 %v1111, 0.2
      %v1144 = vmul.f32 %v1112, 0.2
      %v1145 = vmul.f32 %v1113, 0.2
      %v1146 = vmul.f32 %v1114, 0.2
      %v1147 = vmul.f32 %v1115, 0.2
      %v1148 = vmax.f32 %v1084, %v1116
      %v1149 = vmax.f32 %v1085, %v1117
      %v1150 = vmax.f32 %v1086, %v1118
      %v1151 = vmax.f32 %v1087, %v1119
      %v1152 = vmax.f32 %v1088, %v1120
      %v1153 = vmax.f32 %v1089, %v1121
      %v1154 = vmax.f32 %v1090, %v1122
      %v1155 = vmax.f32 %v1091, %v1123
      %v1156 = vmax.f32 %v1092, %v1124
      %v1157 = vmax.f32 %v1093, %v1125
      %v1158 = vmax.f32 %v1094, %v1126
      %v1159 = vmax.f32 %v1095, %v1127
      %v1160 = vmax.f32 %v1096, %v1128
      %v1161 = vmax.f32 %v1097, %v1129
      %v1162 = vmax.f32 %v1098, %v1130
      %v1163 = vmax.f32 %v1099, %v1131
      %v1164 = vmax.f32 %v1100, %v1132
      %v1165 = vmax.f32 %v1101, %v1133
      %v1166 = vmax.f32 %v1102, %v1134
      %v1167 = vmax.f32 %v1103, %v1135
      %v1168 = vmax.f32 %v1104, %v1136
      %v1169 = vmax.f32 %v1105, %v1137
      %v1170 = vmax.f32 %v1106, %v1138
      %v1171 = vmax.f32 %v1107, %v1139
      %v1172 = vmax.f32 %v1108, %v1140
      %v1173 = vmax.f32 %v1109, %v1141
      %v1174 = vmax.f32 %v1110, %v1142
      %v1175 = vmax.f32 %v1111, %v1143
      %v1176 = vmax.f32 %v1112, %v1144
      %v1177 = vmax.f32 %v1113, %v1145
      %v1178 = vmax.f32 %v1114, %v1146
      %v1179 = vmax.f32 %v1115, %v1147
      %v1180 = vpack.c.bf16 %v1152, %v1148
      %v1181 = vpack.c.bf16 %v1153, %v1149
      %v1182 = vpack.c.bf16 %v1154, %v1150
      %v1183 = vpack.c.bf16 %v1155, %v1151
      %v1184 = vpack.c.bf16 %v1160, %v1156
      %v1185 = vpack.c.bf16 %v1161, %v1157
      %v1186 = vpack.c.bf16 %v1162, %v1158
      %v1187 = vpack.c.bf16 %v1163, %v1159
      %v1188 = vpack.c.bf16 %v1168, %v1164
      %v1189 = vpack.c.bf16 %v1169, %v1165
      %v1190 = vpack.c.bf16 %v1170, %v1166
      %v1191 = vpack.c.bf16 %v1171, %v1167
      %v1192 = vpack.c.bf16 %v1176, %v1172
      %v1193 = vpack.c.bf16 %v1177, %v1173
      %v1194 = vpack.c.bf16 %v1178, %v1174
      %v1195 = vpack.c.bf16 %v1179, %v1175
      %v1212 = vunpack.c.l.b16 %v1180
      %v1213 = vunpack.c.l.b16 %v1181
      %v1214 = vunpack.c.l.b16 %v1182
      %v1215 = vunpack.c.l.b16 %v1183
      %v1216 = vunpack.c.h.b16 %v1180
      %v1217 = vunpack.c.h.b16 %v1181
      %v1218 = vunpack.c.h.b16 %v1182
      %v1219 = vunpack.c.h.b16 %v1183
      %v1220 = vunpack.c.l.b16 %v1184
      %v1221 = vunpack.c.l.b16 %v1185
      %v1222 = vunpack.c.l.b16 %v1186
      %v1223 = vunpack.c.l.b16 %v1187
      %v1224 = vunpack.c.h.b16 %v1184
      %v1225 = vunpack.c.h.b16 %v1185
      %v1226 = vunpack.c.h.b16 %v1186
      %v1227 = vunpack.c.h.b16 %v1187
      %v1228 = vunpack.c.l.b16 %v1188
      %v1229 = vunpack.c.l.b16 %v1189
      %v1230 = vunpack.c.l.b16 %v1190
      %v1231 = vunpack.c.l.b16 %v1191
      %v1232 = vunpack.c.h.b16 %v1188
      %v1233 = vunpack.c.h.b16 %v1189
      %v1234 = vunpack.c.h.b16 %v1190
      %v1235 = vunpack.c.h.b16 %v1191
      %v1236 = vunpack.c.l.b16 %v1192
      %v1237 = vunpack.c.l.b16 %v1193
      %v1238 = vunpack.c.l.b16 %v1194
      %v1239 = vunpack.c.l.b16 %v1195
      %v1240 = vunpack.c.h.b16 %v1192
      %v1241 = vunpack.c.h.b16 %v1193
      %v1242 = vunpack.c.h.b16 %v1194
      %v1243 = vunpack.c.h.b16 %v1195
      %v1244 = vpack.c.b16 %v1213, %v1212
      %v1245 = vpack.c.b16 %v1215, %v1214
      %v1246 = vpack.c.b16 %v1217, %v1216
      %v1247 = vpack.c.b16 %v1219, %v1218
      %v1248 = vpack.c.b16 %v1221, %v1220
      %v1249 = vpack.c.b16 %v1223, %v1222
      %v1250 = vpack.c.b16 %v1225, %v1224
      %v1251 = vpack.c.b16 %v1227, %v1226
      %v1252 = vpack.c.b16 %v1229, %v1228
      %v1253 = vpack.c.b16 %v1231, %v1230
      %v1254 = vpack.c.b16 %v1233, %v1232
      %v1255 = vpack.c.b16 %v1235, %v1234
      %v1256 = vpack.c.b16 %v1237, %v1236
      %v1257 = vpack.c.b16 %v1239, %v1238
      %v1258 = vpack.c.b16 %v1241, %v1240
      %v1259 = vpack.c.b16 %v1243, %v1242
      %1276 = vst [vmem:[#allocation8] sm:$0xff] %v1244
      %1277 = vst [vmem:[#allocation8 + $0x8] sm:$0xff] %v1245
      %1278 = vst [vmem:[#allocation8 + $0x10] sm:$0xff] %v1246
      %1279 = vst [vmem:[#allocation8 + $0x18] sm:$0xff] %v1247
      %1280 = vst [vmem:[#allocation8 + $0x20] sm:$0xff] %v1248
      %1281 = vst [vmem:[#allocation8 + $0x28] sm:$0xff] %v1249
      %1282 = vst [vmem:[#allocation8 + $0x30] sm:$0xff] %v1250
      %1283 = vst [vmem:[#allocation8 + $0x38] sm:$0xff] %v1251
      %1284 = vst [vmem:[#allocation8 + $0x40] sm:$0xff] %v1252
      %1285 = vst [vmem:[#allocation8 + $0x48] sm:$0xff] %v1253
      %1286 = vst [vmem:[#allocation8 + $0x50] sm:$0xff] %v1254
      %1287 = vst [vmem:[#allocation8 + $0x58] sm:$0xff] %v1255
      %1288 = vst [vmem:[#allocation8 + $0x60] sm:$0xff] %v1256
      %1289 = vst [vmem:[#allocation8 + $0x68] sm:$0xff] %v1257
      %1290 = vst [vmem:[#allocation8 + $0x70] sm:$0xff] %v1258
      %1291 = vst [vmem:[#allocation8 + $0x78] sm:$0xff] %v1259
    $region33: #{tpu_custom_call.1} parent=1 // pred_fallthru
      _
    // Predicated region
    $region34: #{tpu_custom_call.1} parent=1 // pred_check
      _
    $region35: #{tpu_custom_call.1} parent=1 // pred_check_branch
      %1293 = sbr.rel (0) target = $region37
    $region36: #{tpu_custom_call.1} parent=1 // pred_region
      %s1295 = ssub.s32 2048, 2048
      %1296 = vsyncadd [#allocation5], %s1295
      %s1297 = sshll.u32 [#allocation8], 4
      %s1298 = int_to_ptr.vmem [resolvable:$true] %s1297
      %1303 = dma.vmem_to_hbm [thread:$0]  %s1298, 2048, %s4, [#allocation5], 256, 256, 16
    $region37: #{tpu_custom_call.1} parent=1 // pred_fallthru
      _
    // Predicated region
    $region38: #{tpu_custom_call.1} parent=1 // pred_check
      _
    $region39: #{tpu_custom_call.1} parent=1 // pred_check_branch
      %1305 = sbr.rel (0) target = $region41
    $region40: #{tpu_custom_call.1} parent=1 // pred_region
      %1306 = dma.done [#allocation5], 2048
    $region41: #{tpu_custom_call.1} parent=1 // pred_fallthru
      _
    %1307 = vsyncpa [#allocation4], 1
    %1308 = vsyncpa [#allocation7], 1
    %1309 = vsyncpa [#allocation5], 1

</llo_original>
